<compile_context>
chip_gen: v7x
topology: tpu7x:2x2x1
jax: 0.10.0
libtpu: 0.0.40
codegen_flags: <defaults>
</compile_context>

<pallas_src>
import functools
import math

import jax
import jax.numpy as jnp
import numpy as np
from jax.experimental import pallas as pl
from jax.experimental.pallas import tpu as pltpu

BN_EPS = 1e-5


def _act(name, x):
    if name in ("tanh", "Tanh"):
        return jnp.tanh(x)
    if name in ("relu", "ReLU"):
        return jnp.maximum(x, 0.0)
    if name in ("leaky_relu",):
        return jnp.where(x >= 0, x, 0.01 * x)
    if name in ("sigmoid", "Sigmoid"):
        return jax.nn.sigmoid(x)
    if name in ("softplus", "Softplus"):
        return jax.nn.softplus(4.0 * x) / 4.0          # nn.Softplus(beta=4)
    if name in ("celu", "CeLU"):
        return jax.nn.celu(x)
    if name in ("elu",):
        return jax.nn.elu(x)
    if name in ("swish",):
        return x * jax.nn.sigmoid(x)
    if name in ("mish",):
        return x * jnp.tanh(jax.nn.softplus(x))
    if name in ("sin",):
        return jnp.sin(x)
    raise ValueError("Unknown activation function")


def _round_up(n, m):
    return -(-n // m) * m


def _ffnn_kernel(x_ref, w_in_ref, b_in_ref, *rest, n_hidden, act_string):
    # rest = [w_h, b_h, s, t]? + [w_out, b_out, o]
    if n_hidden > 0:
        w_h_ref, b_h_ref, s_ref, t_ref, w_out_ref, b_out_ref, o_ref = rest
    else:
        w_out_ref, b_out_ref, o_ref = rest

    # input layer + activation
    h = jnp.dot(x_ref[...], w_in_ref[...], preferred_element_type=jnp.float32)
    h = _act(act_string, h + b_in_ref[...])

    # hidden layers: Linear -> (dropout: identity) -> act -> BN(eval) folded to scale/shift
    for k in range(n_hidden):
        z = jnp.dot(h, w_h_ref[k], preferred_element_type=jnp.float32)
        z = _act(act_string, z + b_h_ref[k])
        h = z * s_ref[k] + t_ref[k]

    # output layer (no activation); output block is lane-padded to a multiple of 128
    out = jnp.dot(h, w_out_ref[...], preferred_element_type=jnp.float32)
    o_ref[...] = (out + b_out_ref[...]).astype(o_ref.dtype)


def feedforward_nn(x, params, *, n_hidden_layers, act_string,
                   tile_m_max=1024, vmem_limit_bytes=32 << 20):
    """Fused forward pass. x: (N, d_in) float32."""
    N, d_in = x.shape
    neurons = params["w_in"].shape[1]
    d_out = params["w_out"].shape[1]
    L = n_hidden_layers - 1

    # ---- wrapper-side parameter prep (cheap, done once per call under jit) ----
    # Fold BatchNorm1d(eval) into per-layer scale/shift.
    if L > 0:
        s = params["gamma"] * jax.lax.rsqrt(params["var"] + BN_EPS)
        t = params["beta"] - params["mean"] * s
        s = s.reshape(L, 1, neurons)
        t = t.reshape(L, 1, neurons)
        b_h = params["b_h"].reshape(L, 1, neurons)
        w_h = params["w_h"]

    # Lane-dense output: pad output features up to a multiple of 128.
    d_out_p = _round_up(max(d_out, 1), 128)
    w_out = params["w_out"]
    b_out = params["b_out"].reshape(1, d_out)
    if d_out_p != d_out:
        w_out = jnp.pad(w_out, ((0, 0), (0, d_out_p - d_out)))
        b_out = jnp.pad(b_out, ((0, 0), (0, d_out_p - d_out)))

    # Batch tile: largest practical tile (sublane-aligned), pad N to a multiple of it.
    tile_m = min(tile_m_max, _round_up(N, 8))
    n_pad = _round_up(N, tile_m)
    x_p = jnp.pad(x, ((0, n_pad - N), (0, 0))) if n_pad != N else x
    grid = (n_pad // tile_m,)

    # ---- BlockSpecs: x/out stream over the batch grid, everything else resident ----
    def resident2(shape):
        return pl.BlockSpec(shape, lambda i: (0, 0))

    def resident3(shape):
        return pl.BlockSpec(shape, lambda i: (0, 0, 0))

    in_specs = [
        pl.BlockSpec((tile_m, d_in), lambda i: (i, 0)),   # x tile
        resident2((d_in, neurons)),                        # w_in
        resident2((1, neurons)),                           # b_in
    ]
    args = [x_p, params["w_in"], params["b_in"].reshape(1, neurons)]
    if L > 0:
        in_specs += [
            resident3((L, neurons, neurons)),              # w_h
            resident3((L, 1, neurons)),                    # b_h
            resident3((L, 1, neurons)),                    # s (BN scale)
            resident3((L, 1, neurons)),                    # t (BN shift)
        ]
        args += [w_h, b_h, s, t]
    in_specs += [resident2((neurons, d_out_p)),            # w_out (lane-padded)
                 resident2((1, d_out_p))]                  # b_out (lane-padded)
    args += [w_out, b_out]

    kernel = functools.partial(_ffnn_kernel, n_hidden=L, act_string=act_string)
    out = pl.pallas_call(
        kernel,
        out_shape=jax.ShapeDtypeStruct((n_pad, d_out_p), x.dtype),
        grid=grid,
        in_specs=in_specs,
        out_specs=pl.BlockSpec((tile_m, d_out_p), lambda i: (i, 0)),
        compiler_params=pltpu.CompilerParams(
            dimension_semantics=("parallel",),             # shard batch over v7x's 2 TCs
            vmem_limit_bytes=vmem_limit_bytes,
        ),
    )(*args)
    return out[:N, :d_out]


# ----------------------------- init & reference -----------------------------

def kaiming_uniform(key, out_f, in_f, a=0.01):
    # torch.nn.init.kaiming_uniform_(W, a=0.01, nonlinearity='leaky_relu'),
    # W has shape (out_f, in_f), fan_in = in_f.  Stored transposed as (in, out).
    gain = math.sqrt(2.0 / (1.0 + a * a))
    bound = gain * math.sqrt(3.0 / in_f)
    w = jax.random.uniform(key, (out_f, in_f), jnp.float32, -bound, bound)
    return w.T


def init_params(key, input_dimension, output_dimension, neurons, n_hidden_layers):
    L = n_hidden_layers - 1
    keys = jax.random.split(key, L + 2)
    w_in = kaiming_uniform(keys[0], neurons, input_dimension)
    b_in = jnp.zeros((1, neurons), jnp.float32)            # kaiming_init zeros biases
    if L > 0:
        w_h = jnp.stack([kaiming_uniform(keys[1 + k], neurons, neurons) for k in range(L)])
    else:
        w_h = jnp.zeros((0, neurons, neurons), jnp.float32)
    b_h = jnp.zeros((L, neurons), jnp.float32)
    gamma = jnp.ones((L, neurons), jnp.float32)
    beta = jnp.zeros((L, neurons), jnp.float32)
    mean = jnp.zeros((L, neurons), jnp.float32)
    var = jnp.ones((L, neurons), jnp.float32)
    w_out = kaiming_uniform(keys[-1], output_dimension, neurons)
    b_out = jnp.zeros((1, output_dimension), jnp.float32)
    return dict(w_in=w_in, b_in=b_in, w_h=w_h, b_h=b_h, gamma=gamma, beta=beta,
                mean=mean, var=var, w_out=w_out, b_out=b_out)


def reference_forward(x, p, *, n_hidden_layers, act_string):
    h = _act(act_string, x @ p["w_in"] + p["b_in"])
    for k in range(n_hidden_layers - 1):
        z = _act(act_string, h @ p["w_h"][k] + p["b_h"][k])
        h = (z - p["mean"][k]) * jax.lax.rsqrt(p["var"][k] + BN_EPS) * p["gamma"][k] + p["beta"][k]
    return h @ p["w_out"] + p["b_out"]


if __name__ == "__main__":
    # network_architecture = {'n_hidden_layers': 3, 'neurons': 32,
    #                         'act_string': 'tanh', 'retrain': 0, 'dropout_rate': 0.1}
    input_dimension = 16
    output_dimension = 4
    neurons = 32
    n_hidden_layers = 3
    act_string = "tanh"
    batch = 8

    key = jax.random.PRNGKey(0)
    k_x, k_p = jax.random.split(key)
    x = jax.random.normal(k_x, (batch, input_dimension), jnp.float32)
    params = init_params(k_p, input_dimension, output_dimension, neurons, n_hidden_layers)

    out = feedforward_nn(x, params, n_hidden_layers=n_hidden_layers, act_string=act_string)
    out = jax.block_until_ready(out)

    ref = reference_forward(x, params, n_hidden_layers=n_hidden_layers, act_string=act_string)
    np.testing.assert_allclose(np.asarray(out), np.asarray(ref), rtol=1e-5, atol=1e-5)

    # Also exercise the n_hidden_layers == 1 (no hidden/BN layers) path.
    params1 = init_params(k_p, input_dimension, output_dimension, neurons, 1)
    out1 = jax.block_until_ready(
        feedforward_nn(x, params1, n_hidden_layers=1, act_string=act_string))
    ref1 = reference_forward(x, params1, n_hidden_layers=1, act_string=act_string)
    np.testing.assert_allclose(np.asarray(out1), np.asarray(ref1), rtol=1e-5, atol=1e-5)

    print("KERNEL_OK")
</pallas_src>

<mosaic_0001>
module attributes {stable_mosaic.version = 11 : i64} {
  func.func @_ffnn_kernel(%arg0: i32, %arg1: memref<8x16xf32, #tpu.memory_space<vmem>>, %arg2: memref<16x32xf32, #tpu.memory_space<vmem>>, %arg3: memref<1x32xf32, #tpu.memory_space<vmem>>, %arg4: memref<2x32x32xf32, #tpu.memory_space<vmem>>, %arg5: memref<2x1x32xf32, #tpu.memory_space<vmem>>, %arg6: memref<2x1x32xf32, #tpu.memory_space<vmem>>, %arg7: memref<2x1x32xf32, #tpu.memory_space<vmem>>, %arg8: memref<32x128xf32, #tpu.memory_space<vmem>>, %arg9: memref<1x128xf32, #tpu.memory_space<vmem>>, %arg10: memref<8x128xf32, #tpu.memory_space<vmem>>) attributes {dimension_semantics = [#tpu.dimension_semantics<parallel>], iteration_bounds = array<i64: 1>, scalar_prefetch = 0 : i64, scratch_operands = 0 : i64, tpu.core_type = #tpu.core_type<tc>, window_params = [{transform_indices = @transform_0, window_bounds = array<i64: 8, 16>}, {pipeline_mode = #tpu.pipeline_mode<synchronous>, transform_indices = @transform_1, window_bounds = array<i64: 16, 32>}, {pipeline_mode = #tpu.pipeline_mode<synchronous>, transform_indices = @transform_2, window_bounds = array<i64: 1, 32>}, {pipeline_mode = #tpu.pipeline_mode<synchronous>, transform_indices = @transform_3, window_bounds = array<i64: 2, 32, 32>}, {pipeline_mode = #tpu.pipeline_mode<synchronous>, transform_indices = @transform_4, window_bounds = array<i64: 2, 1, 32>}, {pipeline_mode = #tpu.pipeline_mode<synchronous>, transform_indices = @transform_5, window_bounds = array<i64: 2, 1, 32>}, {pipeline_mode = #tpu.pipeline_mode<synchronous>, transform_indices = @transform_6, window_bounds = array<i64: 2, 1, 32>}, {pipeline_mode = #tpu.pipeline_mode<synchronous>, transform_indices = @transform_7, window_bounds = array<i64: 32, 128>}, {pipeline_mode = #tpu.pipeline_mode<synchronous>, transform_indices = @transform_8, window_bounds = array<i64: 1, 128>}, {transform_indices = @transform_9, window_bounds = array<i64: 8, 128>}]} {
    %c0 = arith.constant 0 : index
    %c0_0 = arith.constant 0 : index
    %0 = vector.load %arg1[%c0, %c0_0] : memref<8x16xf32, #tpu.memory_space<vmem>>, vector<8x16xf32>
    %c0_1 = arith.constant 0 : index
    %c0_2 = arith.constant 0 : index
    %1 = vector.load %arg2[%c0_1, %c0_2] : memref<16x32xf32, #tpu.memory_space<vmem>>, vector<16x32xf32>
    %cst = arith.constant dense<0.000000e+00> : vector<8x32xf32>
    %2 = tpu.matmul %0, %1, %cst {dimension_numbers = #tpu.dot_dimension_numbers<[1], [0], [0], [1], [0, 0, 1, 1], [], []>} : vector<8x16xf32>, vector<16x32xf32>, vector<8x32xf32> -> vector<8x32xf32>
    %c0_3 = arith.constant 0 : index
    %c0_4 = arith.constant 0 : index
    %3 = vector.load %arg3[%c0_3, %c0_4] : memref<1x32xf32, #tpu.memory_space<vmem>>, vector<1x32xf32>
    %4 = vector.broadcast %3 : vector<1x32xf32> to vector<8x32xf32>
    %5 = arith.addf %2, %4 : vector<8x32xf32>
    %6 = math.tanh %5 : vector<8x32xf32>
    %c0_5 = arith.constant 0 : index
    %c0_6 = arith.constant 0 : index
    %c0_7 = arith.constant 0 : index
    %7 = vector.load %arg4[%c0_5, %c0_6, %c0_7] : memref<2x32x32xf32, #tpu.memory_space<vmem>>, vector<1x32x32xf32>
    %8 = vector.shape_cast %7 : vector<1x32x32xf32> to vector<32x32xf32>
    %cst_8 = arith.constant dense<0.000000e+00> : vector<8x32xf32>
    %9 = tpu.matmul %6, %8, %cst_8 {dimension_numbers = #tpu.dot_dimension_numbers<[1], [0], [0], [1], [0, 0, 1, 1], [], []>} : vector<8x32xf32>, vector<32x32xf32>, vector<8x32xf32> -> vector<8x32xf32>
    %c0_9 = arith.constant 0 : index
    %c0_10 = arith.constant 0 : index
    %c0_11 = arith.constant 0 : index
    %10 = vector.load %arg5[%c0_9, %c0_10, %c0_11] : memref<2x1x32xf32, #tpu.memory_space<vmem>>, vector<1x1x32xf32>
    %11 = vector.shape_cast %10 : vector<1x1x32xf32> to vector<1x32xf32>
    %12 = vector.broadcast %11 : vector<1x32xf32> to vector<8x32xf32>
    %13 = arith.addf %9, %12 : vector<8x32xf32>
    %14 = math.tanh %13 : vector<8x32xf32>
    %c0_12 = arith.constant 0 : index
    %c0_13 = arith.constant 0 : index
    %c0_14 = arith.constant 0 : index
    %15 = vector.load %arg6[%c0_12, %c0_13, %c0_14] : memref<2x1x32xf32, #tpu.memory_space<vmem>>, vector<1x1x32xf32>
    %16 = vector.shape_cast %15 : vector<1x1x32xf32> to vector<1x32xf32>
    %17 = vector.broadcast %16 : vector<1x32xf32> to vector<8x32xf32>
    %18 = arith.mulf %14, %17 : vector<8x32xf32>
    %c0_15 = arith.constant 0 : index
    %c0_16 = arith.constant 0 : index
    %c0_17 = arith.constant 0 : index
    %19 = vector.load %arg7[%c0_15, %c0_16, %c0_17] : memref<2x1x32xf32, #tpu.memory_space<vmem>>, vector<1x1x32xf32>
    %20 = vector.shape_cast %19 : vector<1x1x32xf32> to vector<1x32xf32>
    %21 = vector.broadcast %20 : vector<1x32xf32> to vector<8x32xf32>
    %22 = arith.addf %18, %21 : vector<8x32xf32>
    %c1 = arith.constant 1 : index
    %c0_18 = arith.constant 0 : index
    %c0_19 = arith.constant 0 : index
    %23 = vector.load %arg4[%c1, %c0_18, %c0_19] : memref<2x32x32xf32, #tpu.memory_space<vmem>>, vector<1x32x32xf32>
    %24 = vector.shape_cast %23 : vector<1x32x32xf32> to vector<32x32xf32>
    %cst_20 = arith.constant dense<0.000000e+00> : vector<8x32xf32>
    %25 = tpu.matmul %22, %24, %cst_20 {dimension_numbers = #tpu.dot_dimension_numbers<[1], [0], [0], [1], [0, 0, 1, 1], [], []>} : vector<8x32xf32>, vector<32x32xf32>, vector<8x32xf32> -> vector<8x32xf32>
    %c1_21 = arith.constant 1 : index
    %c0_22 = arith.constant 0 : index
    %c0_23 = arith.constant 0 : index
    %26 = vector.load %arg5[%c1_21, %c0_22, %c0_23] : memref<2x1x32xf32, #tpu.memory_space<vmem>>, vector<1x1x32xf32>
    %27 = vector.shape_cast %26 : vector<1x1x32xf32> to vector<1x32xf32>
    %28 = vector.broadcast %27 : vector<1x32xf32> to vector<8x32xf32>
    %29 = arith.addf %25, %28 : vector<8x32xf32>
    %30 = math.tanh %29 : vector<8x32xf32>
    %c1_24 = arith.constant 1 : index
    %c0_25 = arith.constant 0 : index
    %c0_26 = arith.constant 0 : index
    %31 = vector.load %arg6[%c1_24, %c0_25, %c0_26] : memref<2x1x32xf32, #tpu.memory_space<vmem>>, vector<1x1x32xf32>
    %32 = vector.shape_cast %31 : vector<1x1x32xf32> to vector<1x32xf32>
    %33 = vector.broadcast %32 : vector<1x32xf32> to vector<8x32xf32>
    %34 = arith.mulf %30, %33 : vector<8x32xf32>
    %c1_27 = arith.constant 1 : index
    %c0_28 = arith.constant 0 : index
    %c0_29 = arith.constant 0 : index
    %35 = vector.load %arg7[%c1_27, %c0_28, %c0_29] : memref<2x1x32xf32, #tpu.memory_space<vmem>>, vector<1x1x32xf32>
    %36 = vector.shape_cast %35 : vector<1x1x32xf32> to vector<1x32xf32>
    %37 = vector.broadcast %36 : vector<1x32xf32> to vector<8x32xf32>
    %38 = arith.addf %34, %37 : vector<8x32xf32>
    %c0_30 = arith.constant 0 : index
    %c0_31 = arith.constant 0 : index
    %39 = vector.load %arg8[%c0_30, %c0_31] : memref<32x128xf32, #tpu.memory_space<vmem>>, vector<32x128xf32>
    %cst_32 = arith.constant dense<0.000000e+00> : vector<8x128xf32>
    %40 = tpu.matmul %38, %39, %cst_32 {dimension_numbers = #tpu.dot_dimension_numbers<[1], [0], [0], [1], [0, 0, 1, 1], [], []>} : vector<8x32xf32>, vector<32x128xf32>, vector<8x128xf32> -> vector<8x128xf32>
    %c0_33 = arith.constant 0 : index
    %c0_34 = arith.constant 0 : index
    %41 = vector.load %arg9[%c0_33, %c0_34] : memref<1x128xf32, #tpu.memory_space<vmem>>, vector<1x128xf32>
    %42 = vector.broadcast %41 : vector<1x128xf32> to vector<8x128xf32>
    %43 = arith.addf %40, %42 : vector<8x128xf32>
    %c0_35 = arith.constant 0 : index
    %c0_36 = arith.constant 0 : index
    %44 = vector.load %arg10[%c0_35, %c0_36] : memref<8x128xf32, #tpu.memory_space<vmem>>, vector<8x128xf32>
    tpu.vector_store %arg10[%c0_35, %c0_36], %43 {strides = array<i32>} : memref<8x128xf32, #tpu.memory_space<vmem>>, vector<8x128xf32>,
    return
  }
  func.func @transform_0(%arg0: i32) -> (i32, i32) {
    %c0_i32 = arith.constant 0 : i32
    %c0_i32_0 = arith.constant 0 : i32
    return %arg0, %c0_i32 : i32, i32
  }
  func.func @transform_1(%arg0: i32) -> (i32, i32) {
    %c0_i32 = arith.constant 0 : i32
    %c0_i32_0 = arith.constant 0 : i32
    %c0_i32_1 = arith.constant 0 : i32
    return %c0_i32, %c0_i32_0 : i32, i32
  }
  func.func @transform_2(%arg0: i32) -> (i32, i32) {
    %c0_i32 = arith.constant 0 : i32
    %c0_i32_0 = arith.constant 0 : i32
    %c0_i32_1 = arith.constant 0 : i32
    return %c0_i32, %c0_i32_0 : i32, i32
  }
  func.func @transform_3(%arg0: i32) -> (i32, i32, i32) {
    %c0_i32 = arith.constant 0 : i32
    %c0_i32_0 = arith.constant 0 : i32
    %c0_i32_1 = arith.constant 0 : i32
    %c0_i32_2 = arith.constant 0 : i32
    return %c0_i32, %c0_i32_0, %c0_i32_1 : i32, i32, i32
  }
  func.func @transform_4(%arg0: i32) -> (i32, i32, i32) {
    %c0_i32 = arith.constant 0 : i32
    %c0_i32_0 = arith.constant 0 : i32
    %c0_i32_1 = arith.constant 0 : i32
    %c0_i32_2 = arith.constant 0 : i32
    return %c0_i32, %c0_i32_0, %c0_i32_1 : i32, i32, i32
  }
  func.func @transform_5(%arg0: i32) -> (i32, i32, i32) {
    %c0_i32 = arith.constant 0 : i32
    %c0_i32_0 = arith.constant 0 : i32
    %c0_i32_1 = arith.constant 0 : i32
    %c0_i32_2 = arith.constant 0 : i32
    return %c0_i32, %c0_i32_0, %c0_i32_1 : i32, i32, i32
  }
  func.func @transform_6(%arg0: i32) -> (i32, i32, i32) {
    %c0_i32 = arith.constant 0 : i32
    %c0_i32_0 = arith.constant 0 : i32
    %c0_i32_1 = arith.constant 0 : i32
    %c0_i32_2 = arith.constant 0 : i32
    return %c0_i32, %c0_i32_0, %c0_i32_1 : i32, i32, i32
  }
  func.func @transform_7(%arg0: i32) -> (i32, i32) {
    %c0_i32 = arith.constant 0 : i32
    %c0_i32_0 = arith.constant 0 : i32
    %c0_i32_1 = arith.constant 0 : i32
    return %c0_i32, %c0_i32_0 : i32, i32
  }
  func.func @transform_8(%arg0: i32) -> (i32, i32) {
    %c0_i32 = arith.constant 0 : i32
    %c0_i32_0 = arith.constant 0 : i32
    %c0_i32_1 = arith.constant 0 : i32
    return %c0_i32, %c0_i32_0 : i32, i32
  }
  func.func @transform_9(%arg0: i32) -> (i32, i32) {
    %c0_i32 = arith.constant 0 : i32
    %c0_i32_0 = arith.constant 0 : i32
    return %arg0, %c0_i32 : i32, i32
  }
}

</mosaic_0001>

<llo_original>
// kernel: tpu_custom_call.1
$region0: #{tpu_custom_call.1}
  #allocation0 [shape = 'u32[]', space=smem, size = 0x4, offset = 0x4, fixed_abs, tag = 'smem constant byte address 0x4 - core index']
  #allocation1 [shape = 'u32[144,128]{1,0:T(1,128)}', space=vmem, size = 0x12000, scoped, tag = 'internal scratch']
  %s0 = inlined_call_operand.hbm [shape: f32[8,16], index: 0, kind: input, shape index: {}]
  %s1 = inlined_call_operand.hbm [shape: f32[16,32], index: 1, kind: input, shape index: {}]
  %s2 = inlined_call_operand.vmem [shape: f32[1,32], index: 2, kind: input, shape index: {}]
  %s3 = inlined_call_operand.hbm [shape: f32[2,32,32], index: 3, kind: input, shape index: {}]
  %s4 = inlined_call_operand.vmem [shape: f32[2,1,32], index: 4, kind: input, shape index: {}]
  %s5 = inlined_call_operand.vmem [shape: f32[2,1,32], index: 5, kind: input, shape index: {}]
  %s6 = inlined_call_operand.vmem [shape: f32[2,1,32], index: 6, kind: input, shape index: {}]
  %s7 = inlined_call_operand.hbm [shape: f32[32,128], index: 7, kind: input, shape index: {}]
  %s8 = inlined_call_operand.vmem [shape: f32[1,128], index: 8, kind: input, shape index: {}]
  %s9 = inlined_call_operand.hbm [shape: f32[8,128], index: 9, kind: output, shape index: {}]
  %s10 = sld [smem:[#allocation0]]
  $region62: #{tpu_custom_call.1} parent=0
    _
  %s12 = ssub.s32 1, %s10
  %s13 = scalar_select 0, %s12, %s10
  $region1: #{tpu_custom_call.1} parent=0
    #allocation2 [shape = 'u8[4096]{0}', space=vmem, size = 0x1000, scoped, tag = 'input window, operand 0, single buffered']
    #allocation3 [shape = 's32[1]{0}', space=sflag, size = 0x4, scoped, tag = 'scoped memory for tpu_custom_call.1']
    #allocation4 [shape = 's32[1]{0}', space=sflag, size = 0x4, scoped, tag = 'scoped memory for tpu_custom_call.1']
    #allocation5 [shape = 'u8[8192]{0}', space=vmem, size = 0x2000, scoped, tag = 'input window, operand 1, single buffered']
    #allocation6 [shape = 's32[1]{0}', space=sflag, size = 0x4, scoped, tag = 'scoped memory for tpu_custom_call.1']
    #allocation7 [shape = 'u8[32768]{0}', space=vmem, size = 0x8000, scoped, tag = 'input window, operand 3, single buffered']
    #allocation8 [shape = 'u8[16384]{0}', space=vmem, size = 0x4000, scoped, tag = 'input window, operand 7, single buffered']
    #allocation9 [shape = 's32[1]{0}', space=sflag, size = 0x4, scoped, tag = 'scoped memory for tpu_custom_call.1']
    #allocation10 [shape = 'u8[4096]{0}', space=vmem, size = 0x1000, scoped, tag = 'output window, operand 0, single buffered']
    %14 = vsyncpa [#allocation3], 0
    %15 = vsyncpa [#allocation6], 0
    %16 = vsyncpa [#allocation9], 0
    %17 = vsyncpa [#allocation4], 0
    // Predicated region
    $region2: #{tpu_custom_call.1} parent=1 // pred_check
      _
    $region3: #{tpu_custom_call.1} parent=1 // pred_check_branch
      %19 = sbr.rel (0) target = $region5
    $region4: #{tpu_custom_call.1} parent=1 // pred_region
      %s21 = ssub.s32 128, 128
      %22 = vsyncadd [#allocation3], %s21
      %s24 = sshll.u32 [#allocation2], 4
      %s25 = int_to_ptr.vmem [resolvable:$true] %s24
      %27 = dma.hbm_to_vmem [thread:$0]  %s0, 128, %s25, [#allocation3]
    $region5: #{tpu_custom_call.1} parent=1 // pred_fallthru
      _
    // Predicated region
    $region6: #{tpu_custom_call.1} parent=1 // pred_check
      _
    $region7: #{tpu_custom_call.1} parent=1 // pred_check_branch
      %29 = sbr.rel (0) target = $region9
    $region8: #{tpu_custom_call.1} parent=1 // pred_region
      %s31 = ssub.s32 256, 256
      %32 = vsyncadd [#allocation6], %s31
      %s33 = sshll.u32 [#allocation5], 4
      %s34 = int_to_ptr.vmem [resolvable:$true] %s33
      %39 = dma.hbm_to_vmem [thread:$0]  %s1, 256, %s34, [#allocation6], 128, 128, 8
    $region9: #{tpu_custom_call.1} parent=1 // pred_fallthru
      _
    // Predicated region
    $region10: #{tpu_custom_call.1} parent=1 // pred_check
      _
    $region11: #{tpu_custom_call.1} parent=1 // pred_check_branch
      %41 = sbr.rel (0) target = $region13
    $region12: #{tpu_custom_call.1} parent=1 // pred_region
      _
    $region13: #{tpu_custom_call.1} parent=1 // pred_fallthru
      _
    // Predicated region
    $region14: #{tpu_custom_call.1} parent=1 // pred_check
      _
    $region15: #{tpu_custom_call.1} parent=1 // pred_check_branch
      %43 = sbr.rel (0) target = $region17
    $region16: #{tpu_custom_call.1} parent=1 // pred_region
      %s45 = ssub.s32 1024, 1024
      %46 = vsyncadd [#allocation6], %s45
      %s47 = sshll.u32 [#allocation7], 4
      %s48 = int_to_ptr.vmem [resolvable:$true] %s47
      %53 = dma.hbm_to_vmem [thread:$0]  %s3, 1024, %s48, [#allocation6], 128, 128, 8
    $region17: #{tpu_custom_call.1} parent=1 // pred_fallthru
      _
    // Predicated region
    $region18: #{tpu_custom_call.1} parent=1 // pred_check
      _
    $region19: #{tpu_custom_call.1} parent=1 // pred_check_branch
      %55 = sbr.rel (0) target = $region21
    $region20: #{tpu_custom_call.1} parent=1 // pred_region
      _
    $region21: #{tpu_custom_call.1} parent=1 // pred_fallthru
      _
    // Predicated region
    $region22: #{tpu_custom_call.1} parent=1 // pred_check
      _
    $region23: #{tpu_custom_call.1} parent=1 // pred_check_branch
      %57 = sbr.rel (0) target = $region25
    $region24: #{tpu_custom_call.1} parent=1 // pred_region
      _
    $region25: #{tpu_custom_call.1} parent=1 // pred_fallthru
      _
    // Predicated region
    $region26: #{tpu_custom_call.1} parent=1 // pred_check
      _
    $region27: #{tpu_custom_call.1} parent=1 // pred_check_branch
      %59 = sbr.rel (0) target = $region29
    $region28: #{tpu_custom_call.1} parent=1 // pred_region
      _
    $region29: #{tpu_custom_call.1} parent=1 // pred_fallthru
      _
    // Predicated region
    $region30: #{tpu_custom_call.1} parent=1 // pred_check
      _
    $region31: #{tpu_custom_call.1} parent=1 // pred_check_branch
      %61 = sbr.rel (0) target = $region33
    $region32: #{tpu_custom_call.1} parent=1 // pred_region
      %s63 = ssub.s32 512, 512
      %64 = vsyncadd [#allocation9], %s63
      %s65 = sshll.u32 [#allocation8], 4
      %s66 = int_to_ptr.vmem [resolvable:$true] %s65
      %71 = dma.hbm_to_vmem [thread:$0]  %s7, 512, %s66, [#allocation9], 128, 128, 8
    $region33: #{tpu_custom_call.1} parent=1 // pred_fallthru
      _
    // Predicated region
    $region34: #{tpu_custom_call.1} parent=1 // pred_check
      _
    $region35: #{tpu_custom_call.1} parent=1 // pred_check_branch
      %73 = sbr.rel (0) target = $region37
    $region36: #{tpu_custom_call.1} parent=1 // pred_region
      _
    $region37: #{tpu_custom_call.1} parent=1 // pred_fallthru
      _
    // Predicated region
    $region38: #{tpu_custom_call.1} parent=1 // pred_check
      _
    $region39: #{tpu_custom_call.1} parent=1 // pred_check_branch
      %75 = sbr.rel (0) target = $region41
    $region40: #{tpu_custom_call.1} parent=1 // pred_region
      %76 = dma.done [#allocation3], 128
    $region41: #{tpu_custom_call.1} parent=1 // pred_fallthru
      _
    // Predicated region
    $region42: #{tpu_custom_call.1} parent=1 // pred_check
      _
    $region43: #{tpu_custom_call.1} parent=1 // pred_check_branch
      %78 = sbr.rel (0) target = $region45
    $region44: #{tpu_custom_call.1} parent=1 // pred_region
      %79 = dma.done [#allocation6], 256
    $region45: #{tpu_custom_call.1} parent=1 // pred_fallthru
      _
    // Predicated region
    $region46: #{tpu_custom_call.1} parent=1 // pred_check
      _
    $region47: #{tpu_custom_call.1} parent=1 // pred_check_branch
      %81 = sbr.rel (0) target = $region49
    $region48: #{tpu_custom_call.1} parent=1 // pred_region
      %82 = dma.done [#allocation6], 1024
    $region49: #{tpu_custom_call.1} parent=1 // pred_fallthru
      _
    // Predicated region
    $region50: #{tpu_custom_call.1} parent=1 // pred_check
      _
    $region51: #{tpu_custom_call.1} parent=1 // pred_check_branch
      %84 = sbr.rel (0) target = $region53
    $region52: #{tpu_custom_call.1} parent=1 // pred_region
      %85 = dma.done [#allocation9], 512
    $region53: #{tpu_custom_call.1} parent=1 // pred_fallthru
      _
    %v86 = vld [vmem:[#allocation2] sm:$0xff]
    %v87 = vld [vmem:[#allocation5] sm:$0xff]
    %v88 = vld [vmem:[#allocation5 + $0x8] sm:$0xff]
    %v89 = vld [vmem:[%s2] sm:$0x1]
    %v91 = vlaneseq
    %v92 = vshrl.u32 %v91, 7
    %v93 = vsub.s32 0, %v92
    %v94 = vrot.slane %v89, %v93
    %vm96 = vcmask 130048
    %v98 = vsel %vm96, %v86, 0
    %100 = vmatprep.subr.mxu0 0.0
    %101 = vmatpush1.msra.mxu0 %v87
    %102 = vmatprep.subr.mxu0 0.0
    %103 = vmatpush1.msra.mxu0 %v88
    %104 = vmatprep.subr.mxu0 0.0
    %105 = vmatpush1.msra.mxu0 0.0
    %106 = vmatprep.subr.mxu0 0.0
    %107 = vmatpush1.msra.mxu0 0.0
    %108 = vmatprep.subr.mxu0 0.0
    %109 = vmatpush1.msra.mxu0 0.0
    %110 = vmatprep.subr.mxu0 0.0
    %111 = vmatpush1.msra.mxu0 0.0
    %112 = vmatprep.subr.mxu0 0.0
    %113 = vmatpush1.msra.mxu0 0.0
    %114 = vmatprep.subr.mxu0 0.0
    %115 = vmatpush1.msra.mxu0 0.0
    %116 = vmatprep.subr.mxu0 0.0
    %117 = vmatpush1.msra.mxu0 0.0
    %118 = vmatprep.subr.mxu0 0.0
    %119 = vmatpush1.msra.mxu0 0.0
    %120 = vmatprep.subr.mxu0 0.0
    %121 = vmatpush1.msra.mxu0 0.0
    %122 = vmatprep.subr.mxu0 0.0
    %123 = vmatpush1.msra.mxu0 0.0
    %124 = vmatprep.subr.mxu0 0.0
    %125 = vmatpush1.msra.mxu0 0.0
    %126 = vmatprep.subr.mxu0 0.0
    %127 = vmatpush1.msra.mxu0 0.0
    %128 = vmatprep.subr.mxu0 0.0
    %129 = vmatpush1.msra.mxu0 0.0
    %130 = vmatprep.subr.mxu0 0.0
    %131 = vmatpush1.msra.mxu0 0.0
    %132 = vmatprep.subr.mxu0 0.0
    %133 = vmatpush1.msra.mxu0 0.0
    %134 = vmatprep.subr.mxu0 0.0
    %135 = vmatpush1.msra.mxu0 0.0
    %136 = vmatprep.subr.mxu0 0.0
    %137 = vmatpush1.msra.mxu0 0.0
    %138 = vmatprep.subr.mxu0 0.0
    %139 = vmatpush1.msra.mxu0 0.0
    %140 = vmatprep.subr.mxu0 0.0
    %141 = vmatpush1.msra.mxu0 0.0
    %142 = vmatprep.subr.mxu0 0.0
    %143 = vmatpush1.msra.mxu0 0.0
    %144 = vmatprep.subr.mxu0 0.0
    %145 = vmatpush1.msra.mxu0 0.0
    %146 = vmatprep.subr.mxu0 0.0
    %147 = vmatpush1.msra.mxu0 0.0
    %148 = vmatprep.subr.mxu0 0.0
    %149 = vmatpush1.msra.mxu0 0.0
    %150 = vmatprep.subr.mxu0 0.0
    %151 = vmatpush1.msra.mxu0 0.0
    %152 = vmatprep.subr.mxu0 0.0
    %153 = vmatpush1.msra.mxu0 0.0
    %154 = vmatprep.subr.mxu0 0.0
    %155 = vmatpush1.msra.mxu0 0.0
    %156 = vmatprep.subr.mxu0 0.0
    %157 = vmatpush1.msra.mxu0 0.0
    %158 = vmatprep.subr.mxu0 0.0
    %159 = vmatpush1.msra.mxu0 0.0
    %160 = vmatprep.subr.mxu0 0.0
    %161 = vmatpush1.msra.mxu0 0.0
    %162 = vmatprep.subr.mxu0 0.0
    %163 = vmatpush1.msra.mxu0 0.0
    %164 = vmatprep.mubr.f32.mxu0 0.0
    %165 = vmatmul.mubr.f32.gmra.mrb[0].mxu0 %v98
    %v166 = vpop.f32.mrb[0].mxu0
    %v167 = vadd.f32 %v94, %v166
    %v168 = vpop.f32.mrb[0].mxu0
    %169 = vdwg.mxu0
    %v170 = vtanh.pop %v167
    %v171 = vld [vmem:[#allocation7] sm:$0xff]
    %v172 = vld [vmem:[#allocation7 + $0x8] sm:$0xff]
    %v173 = vld [vmem:[#allocation7 + $0x10] sm:$0xff]
    %v174 = vld [vmem:[#allocation7 + $0x18] sm:$0xff]
    %v175 = vld [vmem:[%s4] sm:$0x1]
    %v177 = vlaneseq
    %v178 = vshrl.u32 %v177, 7
    %v179 = vsub.s32 0, %v178
    %v180 = vrot.slane %v175, %v179
    %vm182 = vcmask 261120
    %v184 = vsel %vm182, %v170, 0
    %186 = vmatprep.subr.mxu0 0.0
    %187 = vmatpush1.msra.mxu0 %v171
    %188 = vmatprep.subr.mxu0 0.0
    %189 = vmatpush1.msra.mxu0 %v172
    %190 = vmatprep.subr.mxu0 0.0
    %191 = vmatpush1.msra.mxu0 %v173
    %192 = vmatprep.subr.mxu0 0.0
    %193 = vmatpush1.msra.mxu0 %v174
    %194 = vmatprep.subr.mxu0 0.0
    %195 = vmatpush1.msra.mxu0 0.0
    %196 = vmatprep.subr.mxu0 0.0
    %197 = vmatpush1.msra.mxu0 0.0
    %198 = vmatprep.subr.mxu0 0.0
    %199 = vmatpush1.msra.mxu0 0.0
    %200 = vmatprep.subr.mxu0 0.0
    %201 = vmatpush1.msra.mxu0 0.0
    %202 = vmatprep.subr.mxu0 0.0
    %203 = vmatpush1.msra.mxu0 0.0
    %204 = vmatprep.subr.mxu0 0.0
    %205 = vmatpush1.msra.mxu0 0.0
    %206 = vmatprep.subr.mxu0 0.0
    %207 = vmatpush1.msra.mxu0 0.0
    %208 = vmatprep.subr.mxu0 0.0
    %209 = vmatpush1.msra.mxu0 0.0
    %210 = vmatprep.subr.mxu0 0.0
    %211 = vmatpush1.msra.mxu0 0.0
    %212 = vmatprep.subr.mxu0 0.0
    %213 = vmatpush1.msra.mxu0 0.0
    %214 = vmatprep.subr.mxu0 0.0
    %215 = vmatpush1.msra.mxu0 0.0
    %216 = vmatprep.subr.mxu0 0.0
    %217 = vmatpush1.msra.mxu0 0.0
    %218 = vmatprep.subr.mxu0 0.0
    %219 = vmatpush1.msra.mxu0 0.0
    %220 = vmatprep.subr.mxu0 0.0
    %221 = vmatpush1.msra.mxu0 0.0
    %222 = vmatprep.subr.mxu0 0.0
    %223 = vmatpush1.msra.mxu0 0.0
    %224 = vmatprep.subr.mxu0 0.0
    %225 = vmatpush1.msra.mxu0 0.0
    %226 = vmatprep.subr.mxu0 0.0
    %227 = vmatpush1.msra.mxu0 0.0
    %228 = vmatprep.subr.mxu0 0.0
    %229 = vmatpush1.msra.mxu0 0.0
    %230 = vmatprep.subr.mxu0 0.0
    %231 = vmatpush1.msra.mxu0 0.0
    %232 = vmatprep.subr.mxu0 0.0
    %233 = vmatpush1.msra.mxu0 0.0
    %234 = vmatprep.subr.mxu0 0.0
    %235 = vmatpush1.msra.mxu0 0.0
    %236 = vmatprep.subr.mxu0 0.0
    %237 = vmatpush1.msra.mxu0 0.0
    %238 = vmatprep.subr.mxu0 0.0
    %239 = vmatpush1.msra.mxu0 0.0
    %240 = vmatprep.subr.mxu0 0.0
    %241 = vmatpush1.msra.mxu0 0.0
    %242 = vmatprep.subr.mxu0 0.0
    %243 = vmatpush1.msra.mxu0 0.0
    %244 = vmatprep.subr.mxu0 0.0
    %245 = vmatpush1.msra.mxu0 0.0
    %246 = vmatprep.subr.mxu0 0.0
    %247 = vmatpush1.msra.mxu0 0.0
    %248 = vmatprep.subr.mxu0 0.0
    %249 = vmatpush1.msra.mxu0 0.0
    %250 = vmatprep.mubr.f32.mxu0 0.0
    %251 = vmatmul.mubr.f32.gmra.mrb[0].mxu0 %v184
    %v252 = vpop.f32.mrb[0].mxu0
    %v253 = vadd.f32 %v180, %v252
    %v254 = vpop.f32.mrb[0].mxu0
    %255 = vdwg.mxu0
    %v256 = vtanh.pop %v253
    %v257 = vld [vmem:[%s5] sm:$0x1]
    %v259 = vlaneseq
    %v260 = vshrl.u32 %v259, 7
    %v261 = vsub.s32 0, %v260
    %v262 = vrot.slane %v257, %v261
    %v264 = vmul.f32 %v256, %v262
    %v265 = vld [vmem:[%s6] sm:$0x1]
    %v267 = vlaneseq
    %v268 = vshrl.u32 %v267, 7
    %v269 = vsub.s32 0, %v268
    %v270 = vrot.slane %v265, %v269
    %v272 = vadd.f32 %v264, %v270
    %s273 = scalar_lea.vmem [#allocation7], 32
    %v274 = vld [vmem:[%s273] sm:$0xff]
    %v275 = vld [vmem:[%s273 + $0x8] sm:$0xff]
    %v276 = vld [vmem:[%s273 + $0x10] sm:$0xff]
    %v277 = vld [vmem:[%s273 + $0x18] sm:$0xff]
    %s278 = scalar_lea.vmem %s4, 1
    %v279 = vld [vmem:[%s278] sm:$0x1]
    %v281 = vlaneseq
    %v282 = vshrl.u32 %v281, 7
    %v283 = vsub.s32 0, %v282
    %v284 = vrot.slane %v279, %v283
    %v287 = vsel %vm182, %v272, 0
    %289 = vmatprep.subr.mxu0 0.0
    %290 = vmatpush1.msra.mxu0 %v274
    %291 = vmatprep.subr.mxu0 0.0
    %292 = vmatpush1.msra.mxu0 %v275
    %293 = vmatprep.subr.mxu0 0.0
    %294 = vmatpush1.msra.mxu0 %v276
    %295 = vmatprep.subr.mxu0 0.0
    %296 = vmatpush1.msra.mxu0 %v277
    %297 = vmatprep.subr.mxu0 0.0
    %298 = vmatpush1.msra.mxu0 0.0
    %299 = vmatprep.subr.mxu0 0.0
    %300 = vmatpush1.msra.mxu0 0.0
    %301 = vmatprep.subr.mxu0 0.0
    %302 = vmatpush1.msra.mxu0 0.0
    %303 = vmatprep.subr.mxu0 0.0
    %304 = vmatpush1.msra.mxu0 0.0
    %305 = vmatprep.subr.mxu0 0.0
    %306 = vmatpush1.msra.mxu0 0.0
    %307 = vmatprep.subr.mxu0 0.0
    %308 = vmatpush1.msra.mxu0 0.0
    %309 = vmatprep.subr.mxu0 0.0
    %310 = vmatpush1.msra.mxu0 0.0
    %311 = vmatprep.subr.mxu0 0.0
    %312 = vmatpush1.msra.mxu0 0.0
    %313 = vmatprep.subr.mxu0 0.0
    %314 = vmatpush1.msra.mxu0 0.0
    %315 = vmatprep.subr.mxu0 0.0
    %316 = vmatpush1.msra.mxu0 0.0
    %317 = vmatprep.subr.mxu0 0.0
    %318 = vmatpush1.msra.mxu0 0.0
    %319 = vmatprep.subr.mxu0 0.0
    %320 = vmatpush1.msra.mxu0 0.0
    %321 = vmatprep.subr.mxu0 0.0
    %322 = vmatpush1.msra.mxu0 0.0
    %323 = vmatprep.subr.mxu0 0.0
    %324 = vmatpush1.msra.mxu0 0.0
    %325 = vmatprep.subr.mxu0 0.0
    %326 = vmatpush1.msra.mxu0 0.0
    %327 = vmatprep.subr.mxu0 0.0
    %328 = vmatpush1.msra.mxu0 0.0
    %329 = vmatprep.subr.mxu0 0.0
    %330 = vmatpush1.msra.mxu0 0.0
    %331 = vmatprep.subr.mxu0 0.0
    %332 = vmatpush1.msra.mxu0 0.0
    %333 = vmatprep.subr.mxu0 0.0
    %334 = vmatpush1.msra.mxu0 0.0
    %335 = vmatprep.subr.mxu0 0.0
    %336 = vmatpush1.msra.mxu0 0.0
    %337 = vmatprep.subr.mxu0 0.0
    %338 = vmatpush1.msra.mxu0 0.0
    %339 = vmatprep.subr.mxu0 0.0
    %340 = vmatpush1.msra.mxu0 0.0
    %341 = vmatprep.subr.mxu0 0.0
    %342 = vmatpush1.msra.mxu0 0.0
    %343 = vmatprep.subr.mxu0 0.0
    %344 = vmatpush1.msra.mxu0 0.0
    %345 = vmatprep.subr.mxu0 0.0
    %346 = vmatpush1.msra.mxu0 0.0
    %347 = vmatprep.subr.mxu0 0.0
    %348 = vmatpush1.msra.mxu0 0.0
    %349 = vmatprep.subr.mxu0 0.0
    %350 = vmatpush1.msra.mxu0 0.0
    %351 = vmatprep.subr.mxu0 0.0
    %352 = vmatpush1.msra.mxu0 0.0
    %353 = vmatprep.mubr.f32.mxu0 0.0
    %354 = vmatmul.mubr.f32.gmra.mrb[0].mxu0 %v287
    %v355 = vpop.f32.mrb[0].mxu0
    %v356 = vadd.f32 %v284, %v355
    %v357 = vpop.f32.mrb[0].mxu0
    %358 = vdwg.mxu0
    %v359 = vtanh.pop %v356
    %s360 = scalar_lea.vmem %s5, 1
    %v361 = vld [vmem:[%s360] sm:$0x1]
    %v363 = vlaneseq
    %v364 = vshrl.u32 %v363, 7
    %v365 = vsub.s32 0, %v364
    %v366 = vrot.slane %v361, %v365
    %v368 = vmul.f32 %v359, %v366
    %s369 = scalar_lea.vmem %s6, 1
    %v370 = vld [vmem:[%s369] sm:$0x1]
    %v372 = vlaneseq
    %v373 = vshrl.u32 %v372, 7
    %v374 = vsub.s32 0, %v373
    %v375 = vrot.slane %v370, %v374
    %v377 = vadd.f32 %v368, %v375
    %v378 = vld [vmem:[#allocation8] sm:$0xff]
    %v379 = vld [vmem:[#allocation8 + $0x8] sm:$0xff]
    %v380 = vld [vmem:[#allocation8 + $0x10] sm:$0xff]
    %v381 = vld [vmem:[#allocation8 + $0x18] sm:$0xff]
    %v382 = vld [vmem:[%s8] sm:$0x1]
    %v384 = vlaneseq
    %v385 = vshrl.u32 %v384, 7
    %v386 = vsub.s32 0, %v385
    %v387 = vrot.slane %v382, %v386
    %v390 = vsel %vm182, %v377, 0
    %392 = vmatprep.subr.mxu0 0.0
    %393 = vmatpush1.msra.mxu0 %v378
    %394 = vmatprep.subr.mxu0 0.0
    %395 = vmatpush1.msra.mxu0 %v379
    %396 = vmatprep.subr.mxu0 0.0
    %397 = vmatpush1.msra.mxu0 %v380
    %398 = vmatprep.subr.mxu0 0.0
    %399 = vmatpush1.msra.mxu0 %v381
    %400 = vmatprep.subr.mxu0 0.0
    %401 = vmatpush1.msra.mxu0 0.0
    %402 = vmatprep.subr.mxu0 0.0
    %403 = vmatpush1.msra.mxu0 0.0
    %404 = vmatprep.subr.mxu0 0.0
    %405 = vmatpush1.msra.mxu0 0.0
    %406 = vmatprep.subr.mxu0 0.0
    %407 = vmatpush1.msra.mxu0 0.0
    %408 = vmatprep.subr.mxu0 0.0
    %409 = vmatpush1.msra.mxu0 0.0
    %410 = vmatprep.subr.mxu0 0.0
    %411 = vmatpush1.msra.mxu0 0.0
    %412 = vmatprep.subr.mxu0 0.0
    %413 = vmatpush1.msra.mxu0 0.0
    %414 = vmatprep.subr.mxu0 0.0
    %415 = vmatpush1.msra.mxu0 0.0
    %416 = vmatprep.subr.mxu0 0.0
    %417 = vmatpush1.msra.mxu0 0.0
    %418 = vmatprep.subr.mxu0 0.0
    %419 = vmatpush1.msra.mxu0 0.0
    %420 = vmatprep.subr.mxu0 0.0
    %421 = vmatpush1.msra.mxu0 0.0
    %422 = vmatprep.subr.mxu0 0.0
    %423 = vmatpush1.msra.mxu0 0.0
    %424 = vmatprep.subr.mxu0 0.0
    %425 = vmatpush1.msra.mxu0 0.0
    %426 = vmatprep.subr.mxu0 0.0
    %427 = vmatpush1.msra.mxu0 0.0
    %428 = vmatprep.subr.mxu0 0.0
    %429 = vmatpush1.msra.mxu0 0.0
    %430 = vmatprep.subr.mxu0 0.0
    %431 = vmatpush1.msra.mxu0 0.0
    %432 = vmatprep.subr.mxu0 0.0
    %433 = vmatpush1.msra.mxu0 0.0
    %434 = vmatprep.subr.mxu0 0.0
    %435 = vmatpush1.msra.mxu0 0.0
    %436 = vmatprep.subr.mxu0 0.0
    %437 = vmatpush1.msra.mxu0 0.0
    %438 = vmatprep.subr.mxu0 0.0
    %439 = vmatpush1.msra.mxu0 0.0
    %440 = vmatprep.subr.mxu0 0.0
    %441 = vmatpush1.msra.mxu0 0.0
    %442 = vmatprep.subr.mxu0 0.0
    %443 = vmatpush1.msra.mxu0 0.0
    %444 = vmatprep.subr.mxu0 0.0
    %445 = vmatpush1.msra.mxu0 0.0
    %446 = vmatprep.subr.mxu0 0.0
    %447 = vmatpush1.msra.mxu0 0.0
    %448 = vmatprep.subr.mxu0 0.0
    %449 = vmatpush1.msra.mxu0 0.0
    %450 = vmatprep.subr.mxu0 0.0
    %451 = vmatpush1.msra.mxu0 0.0
    %452 = vmatprep.subr.mxu0 0.0
    %453 = vmatpush1.msra.mxu0 0.0
    %454 = vmatprep.subr.mxu0 0.0
    %455 = vmatpush1.msra.mxu0 0.0
    %456 = vmatprep.mubr.f32.mxu0 0.0
    %457 = vmatmul.mubr.f32.gmra.mrb[0].mxu0 %v390
    %v458 = vpop.f32.mrb[0].mxu0
    %v459 = vadd.f32 %v387, %v458
    %v460 = vpop.f32.mrb[0].mxu0
    %461 = vdwg.mxu0
    %462 = vst [vmem:[#allocation10] sm:$0xff] %v459
    // Predicated region
    $region54: #{tpu_custom_call.1} parent=1 // pred_check
      _
    $region55: #{tpu_custom_call.1} parent=1 // pred_check_branch
      %464 = sbr.rel (0) target = $region57
    $region56: #{tpu_custom_call.1} parent=1 // pred_region
      %s466 = ssub.s32 128, 128
      %467 = vsyncadd [#allocation4], %s466
      %s469 = sshll.u32 [#allocation10], 4
      %s470 = int_to_ptr.vmem [resolvable:$true] %s469
      %472 = dma.vmem_to_hbm [thread:$0]  %s470, 128, %s9, [#allocation4]
    $region57: #{tpu_custom_call.1} parent=1 // pred_fallthru
      _
    // Predicated region
    $region58: #{tpu_custom_call.1} parent=1 // pred_check
      _
    $region59: #{tpu_custom_call.1} parent=1 // pred_check_branch
      %474 = sbr.rel (0) target = $region61
    $region60: #{tpu_custom_call.1} parent=1 // pred_region
      %475 = dma.done [#allocation4], 128
    $region61: #{tpu_custom_call.1} parent=1 // pred_fallthru
      _
    %476 = vsyncpa [#allocation3], 1
    %477 = vsyncpa [#allocation6], 1
    %478 = vsyncpa [#allocation9], 1
    %479 = vsyncpa [#allocation4], 1

</llo_original>
